<compile_context>
chip_gen: v5e
topology: v5e:2x2
jax: 0.10.0
libtpu: 0.0.40
codegen_flags: <defaults>
</compile_context>

<pallas_src>
import functools

import jax
import jax.numpy as jnp
from jax import lax
from jax.experimental import pallas as pl
from jax.experimental.pallas import tpu as pltpu


def _round_up(a: int, b: int) -> int:
    return ((a + b - 1) // b) * b


def adaptive_linear_kernel(x_ref, wb_ref, a_ref, b_ref, bias_ref, o_ref,
                           acc_ref, xa_ref, *, block_k):
    """Grid = (i over M-tiles, j over N-tiles, k over K-tiles; k innermost).

    acc_ref: (tm, tn)   f32 accumulator for x @ W_base.
    xa_ref : (tm, r_pad) f32 accumulator for x @ A (LoRA intermediate),
             computed only on the j == 0 pass and reused for all other j.
    a_ref  : whole (Kp, r_pad) LoRA-A matrix, resident in VMEM.
    """
    j = pl.program_id(1)
    k = pl.program_id(2)

    @pl.when(k == 0)
    def _init_acc():
        acc_ref[...] = jnp.zeros_like(acc_ref)

    @pl.when(jnp.logical_and(j == 0, k == 0))
    def _init_xa():
        xa_ref[...] = jnp.zeros_like(xa_ref)

    x = x_ref[...]                                                  # (tm, tk)

    # Base matmul partial product (MXU, f32 accumulation).
    acc_ref[...] += jnp.dot(x, wb_ref[...],
                            preferred_element_type=jnp.float32)     # (tm, tn)

    # LoRA intermediate x @ A: only on the first sweep over the output
    # column tiles; the result lives in scratch across the whole j loop.
    @pl.when(j == 0)
    def _lora_a():
        off = pl.multiple_of(k * block_k, block_k)
        a_slab = a_ref[pl.ds(off, block_k), :]                      # (tk, r_pad)
        xa_ref[...] += jnp.dot(x, a_slab,
                               preferred_element_type=jnp.float32)  # (tm, r_pad)

    @pl.when(k == pl.num_programs(2) - 1)
    def _epilogue():
        # Second LoRA matmul is cheap: contraction dim is only r_pad = 128.
        lora = jnp.dot(xa_ref[...], b_ref[...].astype(jnp.float32),
                       preferred_element_type=jnp.float32)          # (tm, tn)
        o_ref[...] = (acc_ref[...] + lora + bias_ref[...]).astype(o_ref.dtype)


@functools.partial(jax.jit, static_argnames=("tm", "tn", "tk"))
def adaptive_linear(x, w_base, b_base, w_lora_a, w_lora_b, b_lora,
                    *, tm=256, tn=512, tk=512):
    """x: (..., in). Weights pre-transposed: w_base (in, out),
    w_lora_a (in, rank), w_lora_b (rank, out). Biases: (out,) each.
    Tiles are clamped to the (padded) problem size, so small shapes work.
    """
    orig_shape = x.shape
    K = orig_shape[-1]
    x2d = x.reshape(-1, K)
    M = x2d.shape[0]
    N = w_base.shape[1]
    r = w_lora_a.shape[1]
    out_dtype = x.dtype

    # Clamp tiles to the aligned problem size; keep sublane multiple-of-8 and
    # lane multiple-of-128 alignment.
    tm_e = min(tm, _round_up(M, 8))
    tn_e = min(tn, _round_up(N, 128))
    tk_e = min(tk, _round_up(K, 128))
    r_pad = _round_up(r, 128)

    Mp = _round_up(M, tm_e)
    Np = _round_up(N, tn_e)
    Kp = _round_up(K, tk_e)

    # Zero-padding is numerically inert: extra K rows/cols are zero, extra
    # M rows / N cols are sliced off afterwards.
    xp = jnp.pad(x2d, ((0, Mp - M), (0, Kp - K)))
    wbp = jnp.pad(w_base, ((0, Kp - K), (0, Np - N)))
    ap = jnp.pad(w_lora_a, ((0, Kp - K), (0, r_pad - r)))
    bp = jnp.pad(w_lora_b, ((0, r_pad - r), (0, Np - N)))
    biasp = jnp.pad((b_base + b_lora).reshape(1, N), ((0, 0), (0, Np - N)))

    grid = (Mp // tm_e, Np // tn_e, Kp // tk_e)

    itemsize = jnp.dtype(out_dtype).itemsize
    cost = pl.CostEstimate(
        flops=2 * M * N * K + 2 * M * r_pad * K + 2 * M * r_pad * N,
        transcendentals=0,
        bytes_accessed=itemsize * (
            grid[1] * Mp * Kp          # x re-read once per N-tile
            + grid[0] * Kp * Np        # W_base re-read once per M-tile
            + Kp * r_pad               # LoRA A (fetched once, VMEM-resident)
            + grid[0] * r_pad * Np     # LoRA B
            + Np                       # combined bias
            + Mp * Np))                # output

    kernel = functools.partial(adaptive_linear_kernel, block_k=tk_e)

    out = pl.pallas_call(
        kernel,
        out_shape=jax.ShapeDtypeStruct((Mp, Np), out_dtype),
        grid_spec=pltpu.PrefetchScalarGridSpec(
            num_scalar_prefetch=0,
            grid=grid,
            in_specs=[
                pl.BlockSpec((tm_e, tk_e), lambda i, j, k: (i, k)),   # x tile
                pl.BlockSpec((tk_e, tn_e), lambda i, j, k: (k, j)),   # W_base slab
                pl.BlockSpec((Kp, r_pad), lambda i, j, k: (0, 0)),    # LoRA A (whole)
                pl.BlockSpec((r_pad, tn_e), lambda i, j, k: (0, j)),  # LoRA B slab
                pl.BlockSpec((1, tn_e), lambda i, j, k: (0, j)),      # combined bias
            ],
            out_specs=pl.BlockSpec((tm_e, tn_e), lambda i, j, k: (i, j)),
            scratch_shapes=[
                pltpu.VMEM((tm_e, tn_e), jnp.float32),   # base accumulator
                pltpu.VMEM((tm_e, r_pad), jnp.float32),  # x@A accumulator
            ],
        ),
        compiler_params=pltpu.CompilerParams(
            dimension_semantics=("parallel", "arbitrary", "arbitrary")),
        cost_estimate=cost,
    )(xp, wbp, ap, bp, biasp)

    return out[:M, :N].reshape(*orig_shape[:-1], N)


def _reference(x, w_base, b_base, w_lora_a, w_lora_b, b_lora):
    hi = lax.Precision.HIGHEST
    base = jnp.matmul(x, w_base, precision=hi) + b_base
    lora = jnp.matmul(jnp.matmul(x, w_lora_a, precision=hi), w_lora_b,
                      precision=hi) + b_lora
    return base + lora


if __name__ == "__main__":
    key = jax.random.PRNGKey(0)

    def make_case(key, batch, seq, in_features, out_features, rank):
        kx, kw, kb, ka, klb, klbb = jax.random.split(key, 6)
        x = jax.random.normal(kx, (batch, seq, in_features), jnp.float32)
        w_base = jax.random.normal(kw, (in_features, out_features), jnp.float32) * 0.05
        b_base = jax.random.normal(kb, (out_features,), jnp.float32) * 0.05
        w_lora_a = jax.random.normal(ka, (in_features, rank), jnp.float32) * 0.05
        w_lora_b = jax.random.normal(klb, (rank, out_features), jnp.float32) * 0.05
        b_lora = jax.random.normal(klbb, (out_features,), jnp.float32) * 0.05
        return x, w_base, b_base, w_lora_a, w_lora_b, b_lora

    k1, k2 = jax.random.split(key)

    # Small, module-spec-sized case (single tile, exercises clamping/padding).
    args1 = make_case(k1, batch=2, seq=8, in_features=32, out_features=32, rank=4)
    y1 = adaptive_linear(*args1)
    jax.block_until_ready(y1)
    ref1 = _reference(*args1)
    assert y1.shape == ref1.shape
    assert jnp.allclose(y1, ref1, atol=1e-4, rtol=1e-4)

    # Larger, non-aligned case exercising the multi-tile (M, N, K) grid, the
    # K-reduction accumulators, the j==0 LoRA gating and padded tail tiles.
    args2 = make_case(k2, batch=2, seq=192, in_features=160, out_features=272,
                      rank=4)
    y2 = adaptive_linear(*args2)
    jax.block_until_ready(y2)
    ref2 = _reference(*args2)
    assert y2.shape == ref2.shape
    assert jnp.allclose(y2, ref2, atol=1e-3, rtol=1e-3)

    print("KERNEL_OK")
</pallas_src>

<mosaic_0001>
module attributes {stable_mosaic.version = 11 : i64} {
  func.func @adaptive_linear_kernel(%arg0: i32, %arg1: i32, %arg2: i32, %arg3: memref<16x128xf32, #tpu.memory_space<vmem>>, %arg4: memref<128x128xf32, #tpu.memory_space<vmem>>, %arg5: memref<128x128xf32, #tpu.memory_space<vmem>>, %arg6: memref<128x128xf32, #tpu.memory_space<vmem>>, %arg7: memref<1x128xf32, #tpu.memory_space<vmem>>, %arg8: memref<16x128xf32, #tpu.memory_space<vmem>>, %arg9: memref<16x128xf32, #tpu.memory_space<vmem>>, %arg10: memref<16x128xf32, #tpu.memory_space<vmem>>) attributes {dimension_semantics = [#tpu.dimension_semantics<parallel>, #tpu.dimension_semantics<arbitrary>, #tpu.dimension_semantics<arbitrary>], iteration_bounds = array<i64: 1, 1, 1>, scalar_prefetch = 0 : i64, scratch_operands = 2 : i64, tpu.core_type = #tpu.core_type<tc>, window_params = [{transform_indices = @transform_0, window_bounds = array<i64: 16, 128>}, {transform_indices = @transform_1, window_bounds = array<i64: 128, 128>}, {pipeline_mode = #tpu.pipeline_mode<synchronous>, transform_indices = @transform_2, window_bounds = array<i64: 128, 128>}, {transform_indices = @transform_3, window_bounds = array<i64: 128, 128>}, {transform_indices = @transform_4, window_bounds = array<i64: 1, 128>}, {transform_indices = @transform_5, window_bounds = array<i64: 16, 128>}]} {
    %c0_i32 = arith.constant 0 : i32
    %0 = arith.cmpi eq, %arg2, %c0_i32 : i32
    %1 = arith.extui %0 : i1 to i32
    %c0_i32_0 = arith.constant 0 : i32
    %2 = arith.cmpi ne, %1, %c0_i32_0 : i32
    scf.if %2 {
      %cst_15 = arith.constant 0.000000e+00 : f32
      %20 = vector.broadcast %cst_15 : f32 to vector<16x128xf32>
      %c0_16 = arith.constant 0 : index
      %c0_17 = arith.constant 0 : index
      %21 = vector.load %arg9[%c0_16, %c0_17] : memref<16x128xf32, #tpu.memory_space<vmem>>, vector<16x128xf32>
      tpu.vector_store %arg9[%c0_16, %c0_17], %20 {strides = array<i32>} : memref<16x128xf32, #tpu.memory_space<vmem>>, vector<16x128xf32>,
    } else {
    }
    %c0_i32_1 = arith.constant 0 : i32
    %3 = arith.cmpi eq, %arg1, %c0_i32_1 : i32
    %c0_i32_2 = arith.constant 0 : i32
    %4 = arith.cmpi eq, %arg2, %c0_i32_2 : i32
    %5 = arith.andi %3, %4 : i1
    %6 = arith.extui %5 : i1 to i32
    %c0_i32_3 = arith.constant 0 : i32
    %7 = arith.cmpi ne, %6, %c0_i32_3 : i32
    scf.if %7 {
      %cst_15 = arith.constant 0.000000e+00 : f32
      %20 = vector.broadcast %cst_15 : f32 to vector<16x128xf32>
      %c0_16 = arith.constant 0 : index
      %c0_17 = arith.constant 0 : index
      %21 = vector.load %arg10[%c0_16, %c0_17] : memref<16x128xf32, #tpu.memory_space<vmem>>, vector<16x128xf32>
      tpu.vector_store %arg10[%c0_16, %c0_17], %20 {strides = array<i32>} : memref<16x128xf32, #tpu.memory_space<vmem>>, vector<16x128xf32>,
    } else {
    }
    %c0 = arith.constant 0 : index
    %c0_4 = arith.constant 0 : index
    %8 = vector.load %arg3[%c0, %c0_4] : memref<16x128xf32, #tpu.memory_space<vmem>>, vector<16x128xf32>
    %c0_5 = arith.constant 0 : index
    %c0_6 = arith.constant 0 : index
    %9 = vector.load %arg9[%c0_5, %c0_6] : memref<16x128xf32, #tpu.memory_space<vmem>>, vector<16x128xf32>
    %c0_7 = arith.constant 0 : index
    %c0_8 = arith.constant 0 : index
    %10 = vector.load %arg4[%c0_7, %c0_8] : memref<128x128xf32, #tpu.memory_space<vmem>>, vector<128x128xf32>
    %cst = arith.constant dense<0.000000e+00> : vector<16x128xf32>
    %11 = tpu.matmul %8, %10, %cst {dimension_numbers = #tpu.dot_dimension_numbers<[1], [0], [0], [1], [0, 0, 1, 1], [], []>} : vector<16x128xf32>, vector<128x128xf32>, vector<16x128xf32> -> vector<16x128xf32>
    %12 = arith.addf %9, %11 : vector<16x128xf32>
    %c0_9 = arith.constant 0 : index
    %c0_10 = arith.constant 0 : index
    %13 = vector.load %arg9[%c0_9, %c0_10] : memref<16x128xf32, #tpu.memory_space<vmem>>, vector<16x128xf32>
    tpu.vector_store %arg9[%c0_9, %c0_10], %12 {strides = array<i32>} : memref<16x128xf32, #tpu.memory_space<vmem>>, vector<16x128xf32>,
    %c0_i32_11 = arith.constant 0 : i32
    %14 = arith.cmpi eq, %arg1, %c0_i32_11 : i32
    %15 = arith.extui %14 : i1 to i32
    %c0_i32_12 = arith.constant 0 : i32
    %16 = arith.cmpi ne, %15, %c0_i32_12 : i32
    scf.if %16 {
      %c128_i32 = arith.constant 128 : i32
      %20 = arith.muli %arg2, %c128_i32 : i32
      %21 = tpu.assume_multiple %20, 128 : i32
      %22 = arith.index_cast %21 : i32 to index
      %c0_15 = arith.constant 0 : index
      %23 = vector.load %arg5[%22, %c0_15] : memref<128x128xf32, #tpu.memory_space<vmem>>, vector<128x128xf32>
      %c0_16 = arith.constant 0 : index
      %c0_17 = arith.constant 0 : index
      %24 = vector.load %arg10[%c0_16, %c0_17] : memref<16x128xf32, #tpu.memory_space<vmem>>, vector<16x128xf32>
      %cst_18 = arith.constant dense<0.000000e+00> : vector<16x128xf32>
      %25 = tpu.matmul %8, %23, %cst_18 {dimension_numbers = #tpu.dot_dimension_numbers<[1], [0], [0], [1], [0, 0, 1, 1], [], []>} : vector<16x128xf32>, vector<128x128xf32>, vector<16x128xf32> -> vector<16x128xf32>
      %26 = arith.addf %24, %25 : vector<16x128xf32>
      %c0_19 = arith.constant 0 : index
      %c0_20 = arith.constant 0 : index
      %27 = vector.load %arg10[%c0_19, %c0_20] : memref<16x128xf32, #tpu.memory_space<vmem>>, vector<16x128xf32>
      tpu.vector_store %arg10[%c0_19, %c0_20], %26 {strides = array<i32>} : memref<16x128xf32, #tpu.memory_space<vmem>>, vector<16x128xf32>,
    } else {
    }
    %c0_i32_13 = arith.constant 0 : i32
    %17 = arith.cmpi eq, %arg2, %c0_i32_13 : i32
    %18 = arith.extui %17 : i1 to i32
    %c0_i32_14 = arith.constant 0 : i32
    %19 = arith.cmpi ne, %18, %c0_i32_14 : i32
    scf.if %19 {
      %c0_15 = arith.constant 0 : index
      %c0_16 = arith.constant 0 : index
      %20 = vector.load %arg10[%c0_15, %c0_16] : memref<16x128xf32, #tpu.memory_space<vmem>>, vector<16x128xf32>
      %c0_17 = arith.constant 0 : index
      %c0_18 = arith.constant 0 : index
      %21 = vector.load %arg6[%c0_17, %c0_18] : memref<128x128xf32, #tpu.memory_space<vmem>>, vector<128x128xf32>
      %cst_19 = arith.constant dense<0.000000e+00> : vector<16x128xf32>
      %22 = tpu.matmul %20, %21, %cst_19 {dimension_numbers = #tpu.dot_dimension_numbers<[1], [0], [0], [1], [0, 0, 1, 1], [], []>} : vector<16x128xf32>, vector<128x128xf32>, vector<16x128xf32> -> vector<16x128xf32>
      %c0_20 = arith.constant 0 : index
      %c0_21 = arith.constant 0 : index
      %23 = vector.load %arg9[%c0_20, %c0_21] : memref<16x128xf32, #tpu.memory_space<vmem>>, vector<16x128xf32>
      %24 = arith.addf %23, %22 : vector<16x128xf32>
      %c0_22 = arith.constant 0 : index
      %c0_23 = arith.constant 0 : index
      %25 = vector.load %arg7[%c0_22, %c0_23] : memref<1x128xf32, #tpu.memory_space<vmem>>, vector<1x128xf32>
      %26 = vector.broadcast %25 : vector<1x128xf32> to vector<16x128xf32>
      %27 = arith.addf %24, %26 : vector<16x128xf32>
      %c0_24 = arith.constant 0 : index
      %c0_25 = arith.constant 0 : index
      %28 = vector.load %arg8[%c0_24, %c0_25] : memref<16x128xf32, #tpu.memory_space<vmem>>, vector<16x128xf32>
      tpu.vector_store %arg8[%c0_24, %c0_25], %27 {strides = array<i32>} : memref<16x128xf32, #tpu.memory_space<vmem>>, vector<16x128xf32>,
    } else {
    }
    return
  }
  func.func @transform_0(%arg0: i32, %arg1: i32, %arg2: i32) -> (i32, i32) {
    %c0_i32 = arith.constant 0 : i32
    return %arg0, %arg2 : i32, i32
  }
  func.func @transform_1(%arg0: i32, %arg1: i32, %arg2: i32) -> (i32, i32) {
    %c0_i32 = arith.constant 0 : i32
    return %arg2, %arg1 : i32, i32
  }
  func.func @transform_2(%arg0: i32, %arg1: i32, %arg2: i32) -> (i32, i32) {
    %c0_i32 = arith.constant 0 : i32
    %c0_i32_0 = arith.constant 0 : i32
    %c0_i32_1 = arith.constant 0 : i32
    return %c0_i32, %c0_i32_0 : i32, i32
  }
  func.func @transform_3(%arg0: i32, %arg1: i32, %arg2: i32) -> (i32, i32) {
    %c0_i32 = arith.constant 0 : i32
    %c0_i32_0 = arith.constant 0 : i32
    return %c0_i32, %arg1 : i32, i32
  }
  func.func @transform_4(%arg0: i32, %arg1: i32, %arg2: i32) -> (i32, i32) {
    %c0_i32 = arith.constant 0 : i32
    %c0_i32_0 = arith.constant 0 : i32
    return %c0_i32, %arg1 : i32, i32
  }
  func.func @transform_5(%arg0: i32, %arg1: i32, %arg2: i32) -> (i32, i32) {
    %c0_i32 = arith.constant 0 : i32
    return %arg0, %arg1 : i32, i32
  }
}

</mosaic_0001>

<llo_original>
// kernel: adaptive_linear.1
$region0: #{adaptive_linear.1}
  #allocation0 [shape = 'u32[]', space=smem, size = 0x4, offset = 0x4, fixed_abs, tag = 'smem constant byte address 0x4 - core index']
  #allocation1 [shape = 'u32[72,128]{1,0:T(1,128)}', space=vmem, size = 0x9000, scoped, tag = 'internal scratch']
  #allocation2 [shape = 'f32[16,128]{1,0:T(8,128)}', space=vmem, size = 0x2000, scoped, tag = 'scratch operand']
  #allocation3 [shape = 'f32[16,128]{1,0:T(8,128)}', space=vmem, size = 0x2000, scoped, tag = 'scratch operand']
  %s0 = inlined_call_operand.vmem [shape: f32[16,128], index: 0, kind: input, shape index: {}]
  %s1 = inlined_call_operand.vmem [shape: f32[128,128], index: 1, kind: input, shape index: {}]
  %s2 = inlined_call_operand.vmem [shape: f32[128,128], index: 2, kind: input, shape index: {}]
  %s3 = inlined_call_operand.vmem [shape: f32[128,128], index: 3, kind: input, shape index: {}]
  %s4 = inlined_call_operand.vmem [shape: f32[1,128], index: 4, kind: input, shape index: {}]
  %s5 = inlined_call_operand.vmem [shape: f32[16,128], index: 5, kind: output, shape index: {}]
  %s6 = sld [smem:[#allocation0]]
  $region46: #{adaptive_linear.1} parent=0
    _
  %s8 = ssub.s32 1, %s6
  %s9 = scalar_select 0, %s8, %s6
  // Predicated region
  $region2: #{adaptive_linear.1} parent=0 // pred_check
    _
  $region3: #{adaptive_linear.1} parent=0 // pred_check_branch
    %11 = sbr.rel (0) target = $region5
  $region4: #{adaptive_linear.1} parent=0 // pred_region
    _
  $region5: #{adaptive_linear.1} parent=0 // pred_fallthru
    _
  // Predicated region
  $region6: #{adaptive_linear.1} parent=0 // pred_check
    _
  $region7: #{adaptive_linear.1} parent=0 // pred_check_branch
    %13 = sbr.rel (0) target = $region9
  $region8: #{adaptive_linear.1} parent=0 // pred_region
    _
  $region9: #{adaptive_linear.1} parent=0 // pred_fallthru
    _
  // Predicated region
  $region10: #{adaptive_linear.1} parent=0 // pred_check
    _
  $region11: #{adaptive_linear.1} parent=0 // pred_check_branch
    %15 = sbr.rel (0) target = $region13
  $region12: #{adaptive_linear.1} parent=0 // pred_region
    _
  $region13: #{adaptive_linear.1} parent=0 // pred_fallthru
    _
  // Predicated region
  $region14: #{adaptive_linear.1} parent=0 // pred_check
    _
  $region15: #{adaptive_linear.1} parent=0 // pred_check_branch
    %17 = sbr.rel (0) target = $region17
  $region16: #{adaptive_linear.1} parent=0 // pred_region
    _
  $region17: #{adaptive_linear.1} parent=0 // pred_fallthru
    _
  // Predicated region
  $region18: #{adaptive_linear.1} parent=0 // pred_check
    _
  $region19: #{adaptive_linear.1} parent=0 // pred_check_branch
    %19 = sbr.rel (0) target = $region21
  $region20: #{adaptive_linear.1} parent=0 // pred_region
    _
  $region21: #{adaptive_linear.1} parent=0 // pred_fallthru
    _
  %p20 = scmp.eq.s32.totalorder 0, 0
  // Predicated region
  $region22: #{adaptive_linear.1} parent=0 // pred_check
    %p21 = pneg %p20
  $region23: #{adaptive_linear.1} parent=0 // pred_check_branch
    %23 = sbr.rel (%p21) target = $region25
  $region24: #{adaptive_linear.1} parent=0 // pred_region
    %24 = vst [vmem:[#allocation2] sm:$0xff] 0.0
    %25 = vst [vmem:[#allocation2 + $0x8] sm:$0xff] 0.0
  $region25: #{adaptive_linear.1} parent=0 // pred_fallthru
    _
  %p26 = scmp.eq.s32.totalorder 0, 0
  %p27 = pnand %p26, %p20
  %p28 = pneg %p27
  // Predicated region
  $region26: #{adaptive_linear.1} parent=0 // pred_check
    _
  $region27: #{adaptive_linear.1} parent=0 // pred_check_branch
    %30 = sbr.rel (%p27) target = $region29
  $region28: #{adaptive_linear.1} parent=0 // pred_region
    %31 = vst [vmem:[#allocation3] sm:$0xff] 0.0
    %32 = vst [vmem:[#allocation3 + $0x8] sm:$0xff] 0.0
  $region29: #{adaptive_linear.1} parent=0 // pred_fallthru
    _
  %v33 = vld [vmem:[%s0] sm:$0xff]
  %v34 = vld [vmem:[%s0 + $0x8] sm:$0xff]
  %v35 = vld [vmem:[#allocation2] sm:$0xff]
  %v36 = vld [vmem:[#allocation2 + $0x8] sm:$0xff]
  %v37 = vld [vmem:[%s1] sm:$0xff]
  %v38 = vld [vmem:[%s1 + $0x8] sm:$0xff]
  %v39 = vld [vmem:[%s1 + $0x10] sm:$0xff]
  %v40 = vld [vmem:[%s1 + $0x18] sm:$0xff]
  %v41 = vld [vmem:[%s1 + $0x20] sm:$0xff]
  %v42 = vld [vmem:[%s1 + $0x28] sm:$0xff]
  %v43 = vld [vmem:[%s1 + $0x30] sm:$0xff]
  %v44 = vld [vmem:[%s1 + $0x38] sm:$0xff]
  %v45 = vld [vmem:[%s1 + $0x40] sm:$0xff]
  %v46 = vld [vmem:[%s1 + $0x48] sm:$0xff]
  %v47 = vld [vmem:[%s1 + $0x50] sm:$0xff]
  %v48 = vld [vmem:[%s1 + $0x58] sm:$0xff]
  %v49 = vld [vmem:[%s1 + $0x60] sm:$0xff]
  %v50 = vld [vmem:[%s1 + $0x68] sm:$0xff]
  %v51 = vld [vmem:[%s1 + $0x70] sm:$0xff]
  %v52 = vld [vmem:[%s1 + $0x78] sm:$0xff]
  %53 = vmatpush.msra.mxu0 %v52
  %54 = vmatpush.msra.mxu0 %v51
  %55 = vmatpush.msra.mxu0 %v50
  %56 = vmatpush.msra.mxu0 %v49
  %57 = vmatpush.msra.mxu0 %v48
  %58 = vmatpush.msra.mxu0 %v47
  %59 = vmatpush.msra.mxu0 %v46
  %60 = vmatpush.msra.mxu0 %v45
  %61 = vmatpush.msra.mxu0 %v44
  %62 = vmatpush.msra.mxu0 %v43
  %63 = vmatpush.msra.mxu0 %v42
  %64 = vmatpush.msra.mxu0 %v41
  %65 = vmatpush.msra.mxu0 %v40
  %66 = vmatpush.msra.mxu0 %v39
  %67 = vmatpush.msra.mxu0 %v38
  %68 = vmatpush.msra.mxu0 %v37
  %69 = vmatmul.f32.gmra.mxu0 %v33
  %v70 = vpop.f32.mrf.mxu0
  %v71 = vadd.f32 0.0, %v70
  %72 = vmatmul.f32.gmra.mxu0 %v34
  %v73 = vpop.f32.mrf.mxu0
  %v74 = vadd.f32 0.0, %v73
  %75 = vdwg.mxu0
  %v76 = vadd.f32 %v35, %v71
  %v77 = vadd.f32 %v36, %v74
  %78 = vst [vmem:[#allocation2] sm:$0xff] %v76
  %79 = vst [vmem:[#allocation2 + $0x8] sm:$0xff] %v77
  // Predicated region
  $region30: #{adaptive_linear.1} parent=0 // pred_check
    %p80 = pneg %p26
  $region31: #{adaptive_linear.1} parent=0 // pred_check_branch
    %82 = sbr.rel (%p80) target = $region33
  $region32: #{adaptive_linear.1} parent=0 // pred_region
    %s83 = smul.u32 0, 128
    %s84 = scalar_lea.vmem %s2, %s83
    %v85 = vld [vmem:[%s84] sm:$0xff]
    %v86 = vld [vmem:[%s84 + $0x8] sm:$0xff]
    %v87 = vld [vmem:[%s84 + $0x10] sm:$0xff]
    %v88 = vld [vmem:[%s84 + $0x18] sm:$0xff]
    %v89 = vld [vmem:[%s84 + $0x20] sm:$0xff]
    %v90 = vld [vmem:[%s84 + $0x28] sm:$0xff]
    %v91 = vld [vmem:[%s84 + $0x30] sm:$0xff]
    %v92 = vld [vmem:[%s84 + $0x38] sm:$0xff]
    %v93 = vld [vmem:[%s84 + $0x40] sm:$0xff]
    %v94 = vld [vmem:[%s84 + $0x48] sm:$0xff]
    %v95 = vld [vmem:[%s84 + $0x50] sm:$0xff]
    %v96 = vld [vmem:[%s84 + $0x58] sm:$0xff]
    %v97 = vld [vmem:[%s84 + $0x60] sm:$0xff]
    %v98 = vld [vmem:[%s84 + $0x68] sm:$0xff]
    %v99 = vld [vmem:[%s84 + $0x70] sm:$0xff]
    %v100 = vld [vmem:[%s84 + $0x78] sm:$0xff]
    %v101 = vld [vmem:[#allocation3] sm:$0xff]
    %v102 = vld [vmem:[#allocation3 + $0x8] sm:$0xff]
    %103 = vmatpush.msra.mxu0 %v100
    %104 = vmatpush.msra.mxu0 %v99
    %105 = vmatpush.msra.mxu0 %v98
    %106 = vmatpush.msra.mxu0 %v97
    %107 = vmatpush.msra.mxu0 %v96
    %108 = vmatpush.msra.mxu0 %v95
    %109 = vmatpush.msra.mxu0 %v94
    %110 = vmatpush.msra.mxu0 %v93
    %111 = vmatpush.msra.mxu0 %v92
    %112 = vmatpush.msra.mxu0 %v91
    %113 = vmatpush.msra.mxu0 %v90
    %114 = vmatpush.msra.mxu0 %v89
    %115 = vmatpush.msra.mxu0 %v88
    %116 = vmatpush.msra.mxu0 %v87
    %117 = vmatpush.msra.mxu0 %v86
    %118 = vmatpush.msra.mxu0 %v85
    %119 = vmatmul.f32.gmra.mxu0 %v33
    %v120 = vpop.f32.mrf.mxu0
    %v121 = vadd.f32 0.0, %v120
    %122 = vmatmul.f32.gmra.mxu0 %v34
    %v123 = vpop.f32.mrf.mxu0
    %v124 = vadd.f32 0.0, %v123
    %125 = vdwg.mxu0
    %v126 = vadd.f32 %v101, %v121
    %v127 = vadd.f32 %v102, %v124
    %128 = vst [vmem:[#allocation3] sm:$0xff] %v126
    %129 = vst [vmem:[#allocation3 + $0x8] sm:$0xff] %v127
  $region33: #{adaptive_linear.1} parent=0 // pred_fallthru
    _
  // Predicated region
  $region34: #{adaptive_linear.1} parent=0 // pred_check
    %p130 = pneg %p20
  $region35: #{adaptive_linear.1} parent=0 // pred_check_branch
    %132 = sbr.rel (%p130) target = $region37
  $region36: #{adaptive_linear.1} parent=0 // pred_region
    %v133 = vld [vmem:[#allocation3] sm:$0xff]
    %v134 = vld [vmem:[#allocation3 + $0x8] sm:$0xff]
    %v135 = vld [vmem:[%s3] sm:$0xff]
    %v136 = vld [vmem:[%s3 + $0x8] sm:$0xff]
    %v137 = vld [vmem:[%s3 + $0x10] sm:$0xff]
    %v138 = vld [vmem:[%s3 + $0x18] sm:$0xff]
    %v139 = vld [vmem:[%s3 + $0x20] sm:$0xff]
    %v140 = vld [vmem:[%s3 + $0x28] sm:$0xff]
    %v141 = vld [vmem:[%s3 + $0x30] sm:$0xff]
    %v142 = vld [vmem:[%s3 + $0x38] sm:$0xff]
    %v143 = vld [vmem:[%s3 + $0x40] sm:$0xff]
    %v144 = vld [vmem:[%s3 + $0x48] sm:$0xff]
    %v145 = vld [vmem:[%s3 + $0x50] sm:$0xff]
    %v146 = vld [vmem:[%s3 + $0x58] sm:$0xff]
    %v147 = vld [vmem:[%s3 + $0x60] sm:$0xff]
    %v148 = vld [vmem:[%s3 + $0x68] sm:$0xff]
    %v149 = vld [vmem:[%s3 + $0x70] sm:$0xff]
    %v150 = vld [vmem:[%s3 + $0x78] sm:$0xff]
    %151 = vmatpush.msra.mxu0 %v150
    %152 = vmatpush.msra.mxu0 %v149
    %153 = vmatpush.msra.mxu0 %v148
    %154 = vmatpush.msra.mxu0 %v147
    %155 = vmatpush.msra.mxu0 %v146
    %156 = vmatpush.msra.mxu0 %v145
    %157 = vmatpush.msra.mxu0 %v144
    %158 = vmatpush.msra.mxu0 %v143
    %159 = vmatpush.msra.mxu0 %v142
    %160 = vmatpush.msra.mxu0 %v141
    %161 = vmatpush.msra.mxu0 %v140
    %162 = vmatpush.msra.mxu0 %v139
    %163 = vmatpush.msra.mxu0 %v138
    %164 = vmatpush.msra.mxu0 %v137
    %165 = vmatpush.msra.mxu0 %v136
    %166 = vmatpush.msra.mxu0 %v135
    %167 = vmatmul.f32.gmra.mxu0 %v133
    %v168 = vpop.f32.mrf.mxu0
    %v169 = vadd.f32 0.0, %v168
    %170 = vmatmul.f32.gmra.mxu0 %v134
    %v171 = vpop.f32.mrf.mxu0
    %v172 = vadd.f32 0.0, %v171
    %173 = vdwg.mxu0
    %v174 = vld [vmem:[#allocation2] sm:$0xff]
    %v175 = vld [vmem:[#allocation2 + $0x8] sm:$0xff]
    %v176 = vadd.f32 %v174, %v169
    %v177 = vadd.f32 %v175, %v172
    %v178 = vld [vmem:[%s4] sm:$0x1]
    %v180 = vperm.slane %v178, 0
    %v182 = vadd.f32 %v176, %v180
    %v183 = vadd.f32 %v177, %v180
    %184 = vst [vmem:[%s5] sm:$0xff] %v182
    %185 = vst [vmem:[%s5 + $0x8] sm:$0xff] %v183
  $region37: #{adaptive_linear.1} parent=0 // pred_fallthru
    _
  // Predicated region
  $region38: #{adaptive_linear.1} parent=0 // pred_check
    _
  $region39: #{adaptive_linear.1} parent=0 // pred_check_branch
    %187 = sbr.rel (0) target = $region41
  $region40: #{adaptive_linear.1} parent=0 // pred_region
    _
  $region41: #{adaptive_linear.1} parent=0 // pred_fallthru
    _
  // Predicated region
  $region42: #{adaptive_linear.1} parent=0 // pred_check
    _
  $region43: #{adaptive_linear.1} parent=0 // pred_check_branch
    %189 = sbr.rel (0) target = $region45
  $region44: #{adaptive_linear.1} parent=0 // pred_region
    _
  $region45: #{adaptive_linear.1} parent=0 // pred_fallthru
    _

</llo_original>
